<compile_context>
chip_gen: v7x
topology: tpu7x:2x2x1
jax: 0.10.0
libtpu: 0.0.40
codegen_flags: <defaults>
</compile_context>

<pallas_src>
import functools
import math

import jax
import jax.numpy as jnp
from jax.experimental import pallas as pl
from jax.experimental.pallas import tpu as pltpu


# ----------------------------- kernel ---------------------------------------


def _bce_accum_kernel(rx1_ref, x1_ref, rx2_ref, x2_ref, rx3_ref, x3_ref,
                      out_ref, *, f_per_core, true_f, needs_mask):
    """Grid = (core_split, batch_tiles, feature_tiles); feature axis reduces.

    Accumulates per-sample BCE lane-partials (b_tile, 128) into the resident
    output block.  KLD / triplet-margin and the final lane reduce are done in
    the JAX glue.
    """
    f = pl.program_id(2)

    # Init the resident accumulator on the first feature step of this block.
    @pl.when(f == 0)
    def _init():
        out_ref[...] = jnp.zeros_like(out_ref)

    b_tile, f_tile = x1_ref.shape

    # torch.binary_cross_entropy semantics: log clamped at -100.
    def bce_tile(rx_ref, x_ref):
        p = rx_ref[...].astype(jnp.float32)
        t = x_ref[...].astype(jnp.float32)
        log_p = jnp.maximum(jnp.log(p), -100.0)
        log_1mp = jnp.maximum(jnp.log(1.0 - p), -100.0)
        return -(t * log_p + (1.0 - t) * log_1mp)

    total = (bce_tile(rx1_ref, x1_ref)
             + bce_tile(rx2_ref, x2_ref)
             + bce_tile(rx3_ref, x3_ref))

    if needs_mask:
        # Mask columns past the true feature count (ragged last tile and any
        # core-split overshoot tile that was clamped to re-read the last block).
        c = pl.program_id(0)
        col0 = (c * f_per_core + f) * f_tile
        cols = jax.lax.broadcasted_iota(jnp.int32, (b_tile, f_tile), 1) + col0
        total = jnp.where(cols < true_f, total, 0.0)

    # Lane-partial accumulation: tree of 128-wide, lane-aligned column adds
    # (pure VPU work, no per-step XLU reduce, no relayout-inducing reshape).
    chunks = [total[:, j * 128:(j + 1) * 128] for j in range(f_tile // 128)]
    while len(chunks) > 1:
        nxt = [chunks[i] + chunks[i + 1] for i in range(0, len(chunks) - 1, 2)]
        if len(chunks) % 2:
            nxt.append(chunks[-1])
        chunks = nxt
    out_ref[...] += chunks[0]


# ----------------------------- planning -------------------------------------


def _vmem_capacity_bytes():
    try:
        return int(pltpu.get_tpu_info().vmem_capacity_bytes)
    except Exception:
        return 64 * 1024 * 1024  # conservative (v7x-class) fallback


def _plan_tiles(B, Fa, itemsize):
    """Pick (b_tile, f_tile, vmem_limit) per TPU generation.

    6 image streams x 2 pipeline buffers = 12 live tiles against the budget.
    """
    vmem_cap = _vmem_capacity_bytes()
    if vmem_cap >= 96 * 1024 * 1024:      # v5e / v6e: 128 MiB physical VMEM
        tile_budget = 48 * 1024 * 1024
        vmem_limit = 64 * 1024 * 1024
    else:                                  # v7x: 64 MiB physical VMEM
        tile_budget = 20 * 1024 * 1024
        vmem_limit = 32 * 1024 * 1024

    if itemsize < 4 and B % 16 == 0:       # bf16 sublane tile is (16, 128)
        b_tile = 16
    elif B % 8 == 0:
        b_tile = 8
    else:
        b_tile = B                         # full-dim block is always legal

    max_f = tile_budget // (12 * b_tile * itemsize)
    max_f = (max_f // 128) * 128
    # 32K cap: each DMA row is already >=128 KiB contiguous and per-step DMA
    # time >> 0.35us grid overhead; also bounds the unrolled lane-add tree.
    max_f = max(128, min(max_f, 32768))
    f_tile = max(128, min(max_f, (Fa // 128) * 128))   # never exceeds Fa
    return b_tile, f_tile, vmem_limit


# ----------------------------- wrapper --------------------------------------


def vae_loss_margin_triplet_contrasive(
    elem1, elem2, elem3, *, alpha=1.0, beta=1.0, gamma=10.0, m=10.0
):
    """JAX/Pallas equivalent of VAEloss_MarginTripletContrasive.forward."""
    B = elem1["x"].shape[0]
    F = math.prod(elem1["x"].shape[1:])  # C*H*W (torch permute is a no-op for the sum)

    # NCHW -> (B, C*H*W) is a metadata reshape; keep NATIVE dtype (cast in-kernel).
    imgs = []
    for e in (elem1, elem2, elem3):
        imgs.append(e["recon_x"].reshape(B, F))
        imgs.append(e["x"].reshape(B, F))

    Fa = F
    if F < 128:
        # Tiny-F corner case only: pad to one 128-lane tile (negligible bytes;
        # zero pads contribute 0 BCE and are masked anyway).
        Fa = 128
        imgs = [jnp.pad(a, ((0, 0), (0, Fa - F))) for a in imgs]

    itemsize = imgs[0].dtype.itemsize
    b_tile, f_tile, vmem_limit = _plan_tiles(B, Fa, itemsize)

    n_b_tiles = B // b_tile
    n_f_tiles = -(-Fa // f_tile)
    # v7x megacore: if there is only one batch tile, split the feature range
    # over a leading "parallel" axis so both TensorCores get work.
    n_split = 2 if (n_b_tiles < 2 and n_f_tiles >= 2) else 1
    f_per_core = -(-n_f_tiles // n_split)
    needs_mask = (F % f_tile != 0) or (n_split * f_per_core != n_f_tiles)

    def img_index_map(c, b, f):
        # Clamp split-overshoot tiles to the last valid block (fully masked
        # in-kernel), so no DMA ever starts past the array end.
        return (b, jnp.minimum(c * f_per_core + f, n_f_tiles - 1))

    image_spec = pl.BlockSpec((b_tile, f_tile), img_index_map)
    # Lane-dense resident accumulator slab per (core-split, batch-tile).
    out_spec = pl.BlockSpec((None, b_tile, 128), lambda c, b, f: (c, b, 0))

    kernel = functools.partial(
        _bce_accum_kernel,
        f_per_core=f_per_core,
        true_f=F,
        needs_mask=needs_mask,
    )

    per_slab = pl.pallas_call(
        kernel,
        grid=(n_split, n_b_tiles, f_per_core),
        in_specs=[image_spec] * 6,
        out_specs=out_spec,
        out_shape=jax.ShapeDtypeStruct((n_split, B, 128), jnp.float32),
        compiler_params=pltpu.CompilerParams(
            dimension_semantics=("parallel", "parallel", "arbitrary"),
            vmem_limit_bytes=vmem_limit,
        ),
    )(*imgs)

    # Single cross-lane reduce (plus core-split sum) done once, in XLA.
    recon_total = jnp.sum(per_slab, axis=(0, 2))  # (B,) == recon1+recon2+recon3

    # Tiny O(B*Z) KLD + triplet-margin work stays in plain-JAX glue.
    def kld(e):
        mu = e["mu"].astype(jnp.float32)
        lv = e["logvar"].astype(jnp.float32)
        return -0.5 * jnp.sum(1.0 + lv - mu * mu - jnp.exp(lv), axis=-1)

    kld_total = kld(elem1) + kld(elem2) + kld(elem3)
    mu1 = elem1["mu"].astype(jnp.float32)
    mu2 = elem2["mu"].astype(jnp.float32)
    mu3 = elem3["mu"].astype(jnp.float32)
    pos_dis = jnp.sqrt(jnp.sum((mu1 - mu2) ** 2, axis=-1))
    neg_dis = jnp.sqrt(jnp.sum((mu1 - mu3) ** 2, axis=-1))
    mc = jnp.maximum(pos_dis + float(m) - neg_dis, 0.0)

    loss = jnp.mean(recon_total * float(alpha)
                    + kld_total * float(beta)
                    + mc * float(gamma))
    return loss, jnp.mean(mc)


# ------------------------------ test harness --------------------------------


def _make_elem(key, batch, channels, height, width, latent):
    k1, k2, k3, k4 = jax.random.split(key, 4)
    mu = jax.random.normal(k1, (batch, latent), dtype=jnp.float32)
    logvar = 0.1 * jax.random.normal(k2, (batch, latent), dtype=jnp.float32)
    recon_x = jax.nn.sigmoid(
        jax.random.normal(k3, (batch, channels, height, width), dtype=jnp.float32)
    )
    x = jax.random.uniform(k4, (batch, channels, height, width), dtype=jnp.float32)
    return {"mu": mu, "logvar": logvar, "recon_x": recon_x, "x": x}


def _reference(elem1, elem2, elem3, alpha, beta, gamma, m):
    def kld(e):
        return -0.5 * jnp.sum(
            1.0 + e["logvar"] - e["mu"] * e["mu"] - jnp.exp(e["logvar"]), axis=-1)

    def recon(e):
        b = e["x"].shape[0]
        p = e["recon_x"].reshape(b, -1).astype(jnp.float32)
        t = e["x"].reshape(b, -1).astype(jnp.float32)
        bce = -(t * jnp.maximum(jnp.log(p), -100.0)
                + (1.0 - t) * jnp.maximum(jnp.log(1.0 - p), -100.0))
        return jnp.sum(bce, axis=-1)

    pos = jnp.sqrt(jnp.sum((elem1["mu"] - elem2["mu"]) ** 2, axis=-1))
    neg = jnp.sqrt(jnp.sum((elem1["mu"] - elem3["mu"]) ** 2, axis=-1))
    mc = jnp.maximum(pos + m - neg, 0.0)
    loss = jnp.mean(
        (recon(elem1) + recon(elem2) + recon(elem3)) * alpha
        + (kld(elem1) + kld(elem2) + kld(elem3)) * beta
        + mc * gamma
    )
    return loss, jnp.mean(mc)


def _run_case(seed, B, C, H, W, Z):
    key = jax.random.PRNGKey(seed)
    k1, k2, k3 = jax.random.split(key, 3)
    elem1 = _make_elem(k1, B, C, H, W, Z)
    elem2 = _make_elem(k2, B, C, H, W, Z)
    elem3 = _make_elem(k3, B, C, H, W, Z)

    loss, margin_mean = vae_loss_margin_triplet_contrasive(
        elem1, elem2, elem3, alpha=1.0, beta=1.0, gamma=10.0, m=10.0
    )
    jax.block_until_ready((loss, margin_mean))

    ref_loss, ref_margin = _reference(elem1, elem2, elem3, 1.0, 1.0, 10.0, 10.0)
    assert jnp.allclose(loss, ref_loss, rtol=1e-4, atol=1e-3), (loss, ref_loss)
    assert jnp.allclose(margin_mean, ref_margin, rtol=1e-4, atol=1e-4), (
        margin_mean, ref_margin)


if __name__ == "__main__":
    # 128-aligned feature count (F = 4*16*16 = 1024): no mask, no core split.
    _run_case(seed=0, B=2, C=4, H=16, W=16, Z=32)
    # Ragged feature count (F = 3*15*17 = 765): exercises the in-kernel column
    # mask and the size-2 feature-split "parallel" axis.
    _run_case(seed=0, B=2, C=3, H=15, W=17, Z=32)
    print("KERNEL_OK")
</pallas_src>

<mosaic_0001>
module attributes {stable_mosaic.version = 11 : i64} {
  func.func @_bce_accum_kernel(%arg0: i32, %arg1: i32, %arg2: i32, %arg3: memref<2x1024xf32, #tpu.memory_space<vmem>>, %arg4: memref<2x1024xf32, #tpu.memory_space<vmem>>, %arg5: memref<2x1024xf32, #tpu.memory_space<vmem>>, %arg6: memref<2x1024xf32, #tpu.memory_space<vmem>>, %arg7: memref<2x1024xf32, #tpu.memory_space<vmem>>, %arg8: memref<2x1024xf32, #tpu.memory_space<vmem>>, %arg9: memref<1x2x128xf32, #tpu.memory_space<vmem>>) attributes {dimension_semantics = [#tpu.dimension_semantics<parallel>, #tpu.dimension_semantics<parallel>, #tpu.dimension_semantics<arbitrary>], iteration_bounds = array<i64: 1, 1, 1>, scalar_prefetch = 0 : i64, scratch_operands = 0 : i64, tpu.core_type = #tpu.core_type<tc>, window_params = [{transform_indices = @transform_0, window_bounds = array<i64: 2, 1024>}, {transform_indices = @transform_1, window_bounds = array<i64: 2, 1024>}, {transform_indices = @transform_2, window_bounds = array<i64: 2, 1024>}, {transform_indices = @transform_3, window_bounds = array<i64: 2, 1024>}, {transform_indices = @transform_4, window_bounds = array<i64: 2, 1024>}, {transform_indices = @transform_5, window_bounds = array<i64: 2, 1024>}, {transform_indices = @transform_6, window_bounds = array<i64: 1, 2, 128>}]} {
    %c0_i32 = arith.constant 0 : i32
    %0 = arith.cmpi eq, %arg2, %c0_i32 : i32
    %1 = arith.extui %0 : i1 to i32
    %c0_i32_0 = arith.constant 0 : i32
    %2 = arith.cmpi ne, %1, %c0_i32_0 : i32
    scf.if %2 {
      %cst_32 = arith.constant 0.000000e+00 : f32
      %77 = vector.broadcast %cst_32 : f32 to vector<2x128xf32>
      %c0_33 = arith.constant 0 : index
      %c0_34 = arith.constant 0 : index
      %c0_35 = arith.constant 0 : index
      %78 = vector.load %arg9[%c0_33, %c0_34, %c0_35] : memref<1x2x128xf32, #tpu.memory_space<vmem>>, vector<1x2x128xf32>
      %79 = vector.shape_cast %78 : vector<1x2x128xf32> to vector<2x128xf32>
      %80 = vector.shape_cast %77 : vector<2x128xf32> to vector<1x2x128xf32>
      tpu.vector_store %arg9[%c0_33, %c0_34, %c0_35], %80 {strides = array<i32>} : memref<1x2x128xf32, #tpu.memory_space<vmem>>, vector<1x2x128xf32>,
    } else {
    }
    %c0 = arith.constant 0 : index
    %c0_1 = arith.constant 0 : index
    %3 = vector.load %arg3[%c0, %c0_1] : memref<2x1024xf32, #tpu.memory_space<vmem>>, vector<2x1024xf32>
    %c0_2 = arith.constant 0 : index
    %c0_3 = arith.constant 0 : index
    %4 = vector.load %arg4[%c0_2, %c0_3] : memref<2x1024xf32, #tpu.memory_space<vmem>>, vector<2x1024xf32>
    %5 = math.log %3 : vector<2x1024xf32>
    %cst = arith.constant -1.000000e+02 : f32
    %6 = vector.broadcast %cst : f32 to vector<2x1024xf32>
    %7 = arith.maximumf %5, %6 : vector<2x1024xf32>
    %cst_4 = arith.constant 1.000000e+00 : f32
    %8 = vector.broadcast %cst_4 : f32 to vector<2x1024xf32>
    %9 = arith.subf %8, %3 : vector<2x1024xf32>
    %10 = math.log %9 : vector<2x1024xf32>
    %cst_5 = arith.constant -1.000000e+02 : f32
    %11 = vector.broadcast %cst_5 : f32 to vector<2x1024xf32>
    %12 = arith.maximumf %10, %11 : vector<2x1024xf32>
    %13 = arith.mulf %4, %7 : vector<2x1024xf32>
    %cst_6 = arith.constant 1.000000e+00 : f32
    %14 = vector.broadcast %cst_6 : f32 to vector<2x1024xf32>
    %15 = arith.subf %14, %4 : vector<2x1024xf32>
    %16 = arith.mulf %15, %12 : vector<2x1024xf32>
    %17 = arith.addf %13, %16 : vector<2x1024xf32>
    %cst_7 = arith.constant 0.000000e+00 : f32
    %18 = vector.broadcast %cst_7 : f32 to vector<2x1024xf32>
    %19 = arith.subf %18, %17 : vector<2x1024xf32>
    %c0_8 = arith.constant 0 : index
    %c0_9 = arith.constant 0 : index
    %20 = vector.load %arg5[%c0_8, %c0_9] : memref<2x1024xf32, #tpu.memory_space<vmem>>, vector<2x1024xf32>
    %c0_10 = arith.constant 0 : index
    %c0_11 = arith.constant 0 : index
    %21 = vector.load %arg6[%c0_10, %c0_11] : memref<2x1024xf32, #tpu.memory_space<vmem>>, vector<2x1024xf32>
    %22 = math.log %20 : vector<2x1024xf32>
    %cst_12 = arith.constant -1.000000e+02 : f32
    %23 = vector.broadcast %cst_12 : f32 to vector<2x1024xf32>
    %24 = arith.maximumf %22, %23 : vector<2x1024xf32>
    %cst_13 = arith.constant 1.000000e+00 : f32
    %25 = vector.broadcast %cst_13 : f32 to vector<2x1024xf32>
    %26 = arith.subf %25, %20 : vector<2x1024xf32>
    %27 = math.log %26 : vector<2x1024xf32>
    %cst_14 = arith.constant -1.000000e+02 : f32
    %28 = vector.broadcast %cst_14 : f32 to vector<2x1024xf32>
    %29 = arith.maximumf %27, %28 : vector<2x1024xf32>
    %30 = arith.mulf %21, %24 : vector<2x1024xf32>
    %cst_15 = arith.constant 1.000000e+00 : f32
    %31 = vector.broadcast %cst_15 : f32 to vector<2x1024xf32>
    %32 = arith.subf %31, %21 : vector<2x1024xf32>
    %33 = arith.mulf %32, %29 : vector<2x1024xf32>
    %34 = arith.addf %30, %33 : vector<2x1024xf32>
    %cst_16 = arith.constant 0.000000e+00 : f32
    %35 = vector.broadcast %cst_16 : f32 to vector<2x1024xf32>
    %36 = arith.subf %35, %34 : vector<2x1024xf32>
    %37 = arith.addf %19, %36 : vector<2x1024xf32>
    %c0_17 = arith.constant 0 : index
    %c0_18 = arith.constant 0 : index
    %38 = vector.load %arg7[%c0_17, %c0_18] : memref<2x1024xf32, #tpu.memory_space<vmem>>, vector<2x1024xf32>
    %c0_19 = arith.constant 0 : index
    %c0_20 = arith.constant 0 : index
    %39 = vector.load %arg8[%c0_19, %c0_20] : memref<2x1024xf32, #tpu.memory_space<vmem>>, vector<2x1024xf32>
    %40 = math.log %38 : vector<2x1024xf32>
    %cst_21 = arith.constant -1.000000e+02 : f32
    %41 = vector.broadcast %cst_21 : f32 to vector<2x1024xf32>
    %42 = arith.maximumf %40, %41 : vector<2x1024xf32>
    %cst_22 = arith.constant 1.000000e+00 : f32
    %43 = vector.broadcast %cst_22 : f32 to vector<2x1024xf32>
    %44 = arith.subf %43, %38 : vector<2x1024xf32>
    %45 = math.log %44 : vector<2x1024xf32>
    %cst_23 = arith.constant -1.000000e+02 : f32
    %46 = vector.broadcast %cst_23 : f32 to vector<2x1024xf32>
    %47 = arith.maximumf %45, %46 : vector<2x1024xf32>
    %48 = arith.mulf %39, %42 : vector<2x1024xf32>
    %cst_24 = arith.constant 1.000000e+00 : f32
    %49 = vector.broadcast %cst_24 : f32 to vector<2x1024xf32>
    %50 = arith.subf %49, %39 : vector<2x1024xf32>
    %51 = arith.mulf %50, %47 : vector<2x1024xf32>
    %52 = arith.addf %48, %51 : vector<2x1024xf32>
    %cst_25 = arith.constant 0.000000e+00 : f32
    %53 = vector.broadcast %cst_25 : f32 to vector<2x1024xf32>
    %54 = arith.subf %53, %52 : vector<2x1024xf32>
    %55 = arith.addf %37, %54 : vector<2x1024xf32>
    %56 = vector.extract_strided_slice %55 {offsets = [0, 0], sizes = [2, 128], strides = [1, 1]} : vector<2x1024xf32> to vector<2x128xf32>
    %57 = vector.extract_strided_slice %55 {offsets = [0, 128], sizes = [2, 128], strides = [1, 1]} : vector<2x1024xf32> to vector<2x128xf32>
    %58 = vector.extract_strided_slice %55 {offsets = [0, 256], sizes = [2, 128], strides = [1, 1]} : vector<2x1024xf32> to vector<2x128xf32>
    %59 = vector.extract_strided_slice %55 {offsets = [0, 384], sizes = [2, 128], strides = [1, 1]} : vector<2x1024xf32> to vector<2x128xf32>
    %60 = vector.extract_strided_slice %55 {offsets = [0, 512], sizes = [2, 128], strides = [1, 1]} : vector<2x1024xf32> to vector<2x128xf32>
    %61 = vector.extract_strided_slice %55 {offsets = [0, 640], sizes = [2, 128], strides = [1, 1]} : vector<2x1024xf32> to vector<2x128xf32>
    %62 = vector.extract_strided_slice %55 {offsets = [0, 768], sizes = [2, 128], strides = [1, 1]} : vector<2x1024xf32> to vector<2x128xf32>
    %63 = vector.extract_strided_slice %55 {offsets = [0, 896], sizes = [2, 128], strides = [1, 1]} : vector<2x1024xf32> to vector<2x128xf32>
    %64 = arith.addf %56, %57 : vector<2x128xf32>
    %65 = arith.addf %58, %59 : vector<2x128xf32>
    %66 = arith.addf %60, %61 : vector<2x128xf32>
    %67 = arith.addf %62, %63 : vector<2x128xf32>
    %68 = arith.addf %64, %65 : vector<2x128xf32>
    %69 = arith.addf %66, %67 : vector<2x128xf32>
    %70 = arith.addf %68, %69 : vector<2x128xf32>
    %c0_26 = arith.constant 0 : index
    %c0_27 = arith.constant 0 : index
    %c0_28 = arith.constant 0 : index
    %71 = vector.load %arg9[%c0_26, %c0_27, %c0_28] : memref<1x2x128xf32, #tpu.memory_space<vmem>>, vector<1x2x128xf32>
    %72 = vector.shape_cast %71 : vector<1x2x128xf32> to vector<2x128xf32>
    %73 = arith.addf %72, %70 : vector<2x128xf32>
    %c0_29 = arith.constant 0 : index
    %c0_30 = arith.constant 0 : index
    %c0_31 = arith.constant 0 : index
    %74 = vector.load %arg9[%c0_29, %c0_30, %c0_31] : memref<1x2x128xf32, #tpu.memory_space<vmem>>, vector<1x2x128xf32>
    %75 = vector.shape_cast %74 : vector<1x2x128xf32> to vector<2x128xf32>
    %76 = vector.shape_cast %73 : vector<2x128xf32> to vector<1x2x128xf32>
    tpu.vector_store %arg9[%c0_29, %c0_30, %c0_31], %76 {strides = array<i32>} : memref<1x2x128xf32, #tpu.memory_space<vmem>>, vector<1x2x128xf32>,
    return
  }
  func.func @transform_0(%arg0: i32, %arg1: i32, %arg2: i32) -> (i32, i32) {
    %c1_i32 = arith.constant 1 : i32
    %0 = arith.muli %arg0, %c1_i32 : i32
    %1 = arith.addi %0, %arg2 : i32
    %c0_i32 = arith.constant 0 : i32
    %2 = arith.minsi %1, %c0_i32 : i32
    %c0_i32_0 = arith.constant 0 : i32
    return %arg1, %2 : i32, i32
  }
  func.func @transform_1(%arg0: i32, %arg1: i32, %arg2: i32) -> (i32, i32) {
    %c1_i32 = arith.constant 1 : i32
    %0 = arith.muli %arg0, %c1_i32 : i32
    %1 = arith.addi %0, %arg2 : i32
    %c0_i32 = arith.constant 0 : i32
    %2 = arith.minsi %1, %c0_i32 : i32
    %c0_i32_0 = arith.constant 0 : i32
    return %arg1, %2 : i32, i32
  }
  func.func @transform_2(%arg0: i32, %arg1: i32, %arg2: i32) -> (i32, i32) {
    %c1_i32 = arith.constant 1 : i32
    %0 = arith.muli %arg0, %c1_i32 : i32
    %1 = arith.addi %0, %arg2 : i32
    %c0_i32 = arith.constant 0 : i32
    %2 = arith.minsi %1, %c0_i32 : i32
    %c0_i32_0 = arith.constant 0 : i32
    return %arg1, %2 : i32, i32
  }
  func.func @transform_3(%arg0: i32, %arg1: i32, %arg2: i32) -> (i32, i32) {
    %c1_i32 = arith.constant 1 : i32
    %0 = arith.muli %arg0, %c1_i32 : i32
    %1 = arith.addi %0, %arg2 : i32
    %c0_i32 = arith.constant 0 : i32
    %2 = arith.minsi %1, %c0_i32 : i32
    %c0_i32_0 = arith.constant 0 : i32
    return %arg1, %2 : i32, i32
  }
  func.func @transform_4(%arg0: i32, %arg1: i32, %arg2: i32) -> (i32, i32) {
    %c1_i32 = arith.constant 1 : i32
    %0 = arith.muli %arg0, %c1_i32 : i32
    %1 = arith.addi %0, %arg2 : i32
    %c0_i32 = arith.constant 0 : i32
    %2 = arith.minsi %1, %c0_i32 : i32
    %c0_i32_0 = arith.constant 0 : i32
    return %arg1, %2 : i32, i32
  }
  func.func @transform_5(%arg0: i32, %arg1: i32, %arg2: i32) -> (i32, i32) {
    %c1_i32 = arith.constant 1 : i32
    %0 = arith.muli %arg0, %c1_i32 : i32
    %1 = arith.addi %0, %arg2 : i32
    %c0_i32 = arith.constant 0 : i32
    %2 = arith.minsi %1, %c0_i32 : i32
    %c0_i32_0 = arith.constant 0 : i32
    return %arg1, %2 : i32, i32
  }
  func.func @transform_6(%arg0: i32, %arg1: i32, %arg2: i32) -> (i32, i32, i32) {
    %c0_i32 = arith.constant 0 : i32
    %c0_i32_0 = arith.constant 0 : i32
    return %arg0, %arg1, %c0_i32 : i32, i32, i32
  }
}

</mosaic_0001>

<llo_original>
// kernel: tpu_custom_call.1
$region0: #{tpu_custom_call.1}
  #allocation0 [shape = 'u32[]', space=smem, size = 0x4, offset = 0x4, fixed_abs, tag = 'smem constant byte address 0x4 - core index']
  #allocation1 [shape = 'u32[144,128]{1,0:T(1,128)}', space=vmem, size = 0x12000, scoped, tag = 'internal scratch']
  %s0 = inlined_call_operand.hbm [shape: f32[2,1024], index: 0, kind: input, shape index: {}]
  %s1 = inlined_call_operand.hbm [shape: f32[2,1024], index: 1, kind: input, shape index: {}]
  %s2 = inlined_call_operand.hbm [shape: f32[2,1024], index: 2, kind: input, shape index: {}]
  %s3 = inlined_call_operand.hbm [shape: f32[2,1024], index: 3, kind: input, shape index: {}]
  %s4 = inlined_call_operand.hbm [shape: f32[2,1024], index: 4, kind: input, shape index: {}]
  %s5 = inlined_call_operand.vmem [shape: f32[2,1024], index: 5, kind: input, shape index: {}]
  %s6 = inlined_call_operand.hbm [shape: f32[1,2,128], index: 6, kind: output, shape index: {}]
  %s7 = sld [smem:[#allocation0]]
  $region58: #{tpu_custom_call.1} parent=0
    _
  %s9 = ssub.s32 1, %s7
  %s10 = scalar_select 0, %s9, %s7
  $region1: #{tpu_custom_call.1} parent=0
    #allocation2 [shape = 'u8[8192]{0}', space=vmem, size = 0x2000, scoped, tag = 'input window, operand 0, single buffered']
    #allocation3 [shape = 's32[1]{0}', space=sflag, size = 0x4, scoped, tag = 'scoped memory for tpu_custom_call.1']
    #allocation4 [shape = 's32[1]{0}', space=sflag, size = 0x4, scoped, tag = 'scoped memory for tpu_custom_call.1']
    #allocation5 [shape = 'u8[8192]{0}', space=vmem, size = 0x2000, scoped, tag = 'input window, operand 1, single buffered']
    #allocation6 [shape = 's32[1]{0}', space=sflag, size = 0x4, scoped, tag = 'scoped memory for tpu_custom_call.1']
    #allocation7 [shape = 'u8[8192]{0}', space=vmem, size = 0x2000, scoped, tag = 'input window, operand 2, single buffered']
    #allocation8 [shape = 'u8[8192]{0}', space=vmem, size = 0x2000, scoped, tag = 'input window, operand 3, single buffered']
    #allocation9 [shape = 's32[1]{0}', space=sflag, size = 0x4, scoped, tag = 'scoped memory for tpu_custom_call.1']
    #allocation10 [shape = 'u8[8192]{0}', space=vmem, size = 0x2000, scoped, tag = 'input window, operand 4, single buffered']
    #allocation11 [shape = 'u8[1024]{0}', space=vmem, size = 0x400, scoped, tag = 'output window, operand 0, single buffered']
    %11 = vsyncpa [#allocation3], 0
    %12 = vsyncpa [#allocation6], 0
    %13 = vsyncpa [#allocation9], 0
    %14 = vsyncpa [#allocation4], 0
    // Predicated region
    $region2: #{tpu_custom_call.1} parent=1 // pred_check
      _
    $region3: #{tpu_custom_call.1} parent=1 // pred_check_branch
      %16 = sbr.rel (0) target = $region5
    $region4: #{tpu_custom_call.1} parent=1 // pred_region
      %s17 = sadd.s32 0, 0
      %p18 = scmp.lt.s32.totalorder %s17, 0
      %s19 = scalar_select %p18, %s17, 0
      %s20 = smul.u32 8, %s19
      %s22 = ssub.s32 256, 256
      %23 = vsyncadd [#allocation3], %s22
      %s24 = smul.addr %s20, 32
      %s25 = scalar_lea.hbm %s0, %s24
      %s27 = sshll.u32 [#allocation2], 4
      %s28 = int_to_ptr.vmem [resolvable:$true] %s27
      %30 = dma.hbm_to_vmem [thread:$0]  %s25, 256, %s28, [#allocation3]
    $region5: #{tpu_custom_call.1} parent=1 // pred_fallthru
      _
    // Predicated region
    $region6: #{tpu_custom_call.1} parent=1 // pred_check
      _
    $region7: #{tpu_custom_call.1} parent=1 // pred_check_branch
      %32 = sbr.rel (0) target = $region9
    $region8: #{tpu_custom_call.1} parent=1 // pred_region
      %s33 = sadd.s32 0, 0
      %p34 = scmp.lt.s32.totalorder %s33, 0
      %s35 = scalar_select %p34, %s33, 0
      %s36 = smul.u32 8, %s35
      %s38 = ssub.s32 256, 256
      %39 = vsyncadd [#allocation6], %s38
      %s40 = smul.addr %s36, 32
      %s41 = scalar_lea.hbm %s1, %s40
      %s43 = sshll.u32 [#allocation5], 4
      %s44 = int_to_ptr.vmem [resolvable:$true] %s43
      %46 = dma.hbm_to_vmem [thread:$0]  %s41, 256, %s44, [#allocation6]
    $region9: #{tpu_custom_call.1} parent=1 // pred_fallthru
      _
    // Predicated region
    $region10: #{tpu_custom_call.1} parent=1 // pred_check
      _
    $region11: #{tpu_custom_call.1} parent=1 // pred_check_branch
      %48 = sbr.rel (0) target = $region13
    $region12: #{tpu_custom_call.1} parent=1 // pred_region
      %s49 = sadd.s32 0, 0
      %p50 = scmp.lt.s32.totalorder %s49, 0
      %s51 = scalar_select %p50, %s49, 0
      %s52 = smul.u32 8, %s51
      %s54 = ssub.s32 256, 256
      %55 = vsyncadd [#allocation6], %s54
      %s56 = smul.addr %s52, 32
      %s57 = scalar_lea.hbm %s2, %s56
      %s59 = sshll.u32 [#allocation7], 4
      %s60 = int_to_ptr.vmem [resolvable:$true] %s59
      %62 = dma.hbm_to_vmem [thread:$0]  %s57, 256, %s60, [#allocation6]
    $region13: #{tpu_custom_call.1} parent=1 // pred_fallthru
      _
    // Predicated region
    $region14: #{tpu_custom_call.1} parent=1 // pred_check
      _
    $region15: #{tpu_custom_call.1} parent=1 // pred_check_branch
      %64 = sbr.rel (0) target = $region17
    $region16: #{tpu_custom_call.1} parent=1 // pred_region
      %s65 = sadd.s32 0, 0
      %p66 = scmp.lt.s32.totalorder %s65, 0
      %s67 = scalar_select %p66, %s65, 0
      %s68 = smul.u32 8, %s67
      %s70 = ssub.s32 256, 256
      %71 = vsyncadd [#allocation9], %s70
      %s72 = smul.addr %s68, 32
      %s73 = scalar_lea.hbm %s3, %s72
      %s75 = sshll.u32 [#allocation8], 4
      %s76 = int_to_ptr.vmem [resolvable:$true] %s75
      %78 = dma.hbm_to_vmem [thread:$0]  %s73, 256, %s76, [#allocation9]
    $region17: #{tpu_custom_call.1} parent=1 // pred_fallthru
      _
    // Predicated region
    $region18: #{tpu_custom_call.1} parent=1 // pred_check
      _
    $region19: #{tpu_custom_call.1} parent=1 // pred_check_branch
      %80 = sbr.rel (0) target = $region21
    $region20: #{tpu_custom_call.1} parent=1 // pred_region
      %s81 = sadd.s32 0, 0
      %p82 = scmp.lt.s32.totalorder %s81, 0
      %s83 = scalar_select %p82, %s81, 0
      %s84 = smul.u32 8, %s83
      %s86 = ssub.s32 256, 256
      %87 = vsyncadd [#allocation9], %s86
      %s88 = smul.addr %s84, 32
      %s89 = scalar_lea.hbm %s4, %s88
      %s91 = sshll.u32 [#allocation10], 4
      %s92 = int_to_ptr.vmem [resolvable:$true] %s91
      %94 = dma.hbm_to_vmem [thread:$0]  %s89, 256, %s92, [#allocation9]
    $region21: #{tpu_custom_call.1} parent=1 // pred_fallthru
      _
    // Predicated region
    $region22: #{tpu_custom_call.1} parent=1 // pred_check
      _
    $region23: #{tpu_custom_call.1} parent=1 // pred_check_branch
      %96 = sbr.rel (0) target = $region25
    $region24: #{tpu_custom_call.1} parent=1 // pred_region
      %s97 = sadd.s32 0, 0
      %p98 = scmp.lt.s32.totalorder %s97, 0
      %s99 = scalar_select %p98, %s97, 0
      %s100 = smul.u32 8, %s99
      %p101 = scmp.lt.s32.totalorder %s100, 7
      %s102 = scalar_select %p101, %s100, 7
      %s103 = smul.addr %s102, 2
      %s104 = scalar_lea.vmem %s5, %s103
      %s105 = sadd.s32 0, 0
      %p106 = scmp.lt.s32.totalorder %s105, 0
      %s107 = scalar_select %p106, %s105, 0
      %s108 = smul.u32 8, %s107
    $region25: #{tpu_custom_call.1} parent=1 // pred_fallthru
      _
    // Predicated region
    $region26: #{tpu_custom_call.1} parent=1 // pred_check
      _
    $region27: #{tpu_custom_call.1} parent=1 // pred_check_branch
      %110 = sbr.rel (0) target = $region29
    $region28: #{tpu_custom_call.1} parent=1 // pred_region
      %111 = dma.done [#allocation3], 256
    $region29: #{tpu_custom_call.1} parent=1 // pred_fallthru
      _
    // Predicated region
    $region30: #{tpu_custom_call.1} parent=1 // pred_check
      _
    $region31: #{tpu_custom_call.1} parent=1 // pred_check_branch
      %113 = sbr.rel (0) target = $region33
    $region32: #{tpu_custom_call.1} parent=1 // pred_region
      %114 = dma.done [#allocation6], 256
    $region33: #{tpu_custom_call.1} parent=1 // pred_fallthru
      _
    // Predicated region
    $region34: #{tpu_custom_call.1} parent=1 // pred_check
      _
    $region35: #{tpu_custom_call.1} parent=1 // pred_check_branch
      %116 = sbr.rel (0) target = $region37
    $region36: #{tpu_custom_call.1} parent=1 // pred_region
      %117 = dma.done [#allocation6], 256
    $region37: #{tpu_custom_call.1} parent=1 // pred_fallthru
      _
    // Predicated region
    $region38: #{tpu_custom_call.1} parent=1 // pred_check
      _
    $region39: #{tpu_custom_call.1} parent=1 // pred_check_branch
      %119 = sbr.rel (0) target = $region41
    $region40: #{tpu_custom_call.1} parent=1 // pred_region
      %120 = dma.done [#allocation9], 256
    $region41: #{tpu_custom_call.1} parent=1 // pred_fallthru
      _
    // Predicated region
    $region42: #{tpu_custom_call.1} parent=1 // pred_check
      _
    $region43: #{tpu_custom_call.1} parent=1 // pred_check_branch
      %122 = sbr.rel (0) target = $region45
    $region44: #{tpu_custom_call.1} parent=1 // pred_region
      %123 = dma.done [#allocation9], 256
    $region45: #{tpu_custom_call.1} parent=1 // pred_fallthru
      _
    %s124 = sadd.s32 0, 0
    %p125 = scmp.lt.s32.totalorder %s124, 0
    %s126 = scalar_select %p125, %s124, 0
    %s127 = smul.u32 8, %s126
    %p128 = scmp.lt.s32.totalorder %s127, 7
    %s129 = scalar_select %p128, %s127, 7
    %s130 = smul.addr %s129, 2
    %s131 = scalar_lea.vmem %s5, %s130
    %s132 = sadd.s32 0, 0
    %p133 = scmp.lt.s32.totalorder %s132, 0
    %s134 = scalar_select %p133, %s132, 0
    %s135 = smul.u32 8, %s134
    %s136 = sadd.s32 0, 0
    %p137 = scmp.lt.s32.totalorder %s136, 0
    %s138 = scalar_select %p137, %s136, 0
    %s139 = smul.u32 8, %s138
    %s140 = sadd.s32 0, 0
    %p141 = scmp.lt.s32.totalorder %s140, 0
    %s142 = scalar_select %p141, %s140, 0
    %s143 = smul.u32 8, %s142
    %s144 = sadd.s32 0, 0
    %p145 = scmp.lt.s32.totalorder %s144, 0
    %s146 = scalar_select %p145, %s144, 0
    %s147 = smul.u32 8, %s146
    %s148 = sadd.s32 0, 0
    %p149 = scmp.lt.s32.totalorder %s148, 0
    %s150 = scalar_select %p149, %s148, 0
    %s151 = smul.u32 8, %s150
    %s152 = sadd.s32 0, 0
    %p153 = scmp.lt.s32.totalorder %s152, 0
    %s154 = scalar_select %p153, %s152, 0
    %s155 = smul.u32 8, %s154
    %p156 = scmp.lt.s32.totalorder %s155, 7
    %s157 = scalar_select %p156, %s155, 7
    %s158 = smul.addr %s157, 2
    %s159 = scalar_lea.vmem %s5, %s158
    %s160 = sadd.s32 0, 0
    %p161 = scmp.lt.s32.totalorder %s160, 0
    %s162 = scalar_select %p161, %s160, 0
    %s163 = smul.u32 8, %s162
    %p164 = scmp.eq.s32.totalorder 0, 0
    // Predicated region
    $region46: #{tpu_custom_call.1} parent=1 // pred_check
      %p165 = pneg %p164
    $region47: #{tpu_custom_call.1} parent=1 // pred_check_branch
      %167 = sbr.rel (%p165) target = $region49
    $region48: #{tpu_custom_call.1} parent=1 // pred_region
      %168 = vst [vmem:[#allocation11] sm:$0x3] 0.0
    $region49: #{tpu_custom_call.1} parent=1 // pred_fallthru
      _
    %v169 = vld [vmem:[#allocation2] sm:$0xff]
    %v170 = vld [vmem:[#allocation2 + $0x8] sm:$0xff]
    %v171 = vld [vmem:[#allocation5] sm:$0xff]
    %v172 = vld [vmem:[#allocation5 + $0x8] sm:$0xff]
    %v173 = vlog2.pop %v169
    %v174 = vmul.f32 %v173, 0.6931472
    %v175 = vlog2.pop %v170
    %v176 = vmul.f32 %v175, 0.6931472
    %v177 = vmax.f32 %v174, -100.0
    %v178 = vmax.f32 %v176, -100.0
    %v179 = vsub.f32 1.0, %v169
    %v180 = vsub.f32 1.0, %v170
    %v181 = vlog2.pop %v179
    %v182 = vmul.f32 %v181, 0.6931472
    %v183 = vlog2.pop %v180
    %v184 = vmul.f32 %v183, 0.6931472
    %v185 = vmax.f32 %v182, -100.0
    %v186 = vmax.f32 %v184, -100.0
    %v187 = vmul.f32 %v171, %v177
    %v188 = vmul.f32 %v172, %v178
    %v189 = vsub.f32 1.0, %v171
    %v190 = vsub.f32 1.0, %v172
    %v191 = vmul.f32 %v189, %v185
    %v192 = vmul.f32 %v190, %v186
    %v193 = vadd.f32 %v187, %v191
    %v194 = vadd.f32 %v188, %v192
    %v195 = vsub.f32 0.0, %v193
    %v196 = vsub.f32 0.0, %v194
    %v197 = vld [vmem:[#allocation7] sm:$0xff]
    %v198 = vld [vmem:[#allocation7 + $0x8] sm:$0xff]
    %v199 = vld [vmem:[#allocation8] sm:$0xff]
    %v200 = vld [vmem:[#allocation8 + $0x8] sm:$0xff]
    %v201 = vlog2.pop %v197
    %v202 = vmul.f32 %v201, 0.6931472
    %v203 = vlog2.pop %v198
    %v204 = vmul.f32 %v203, 0.6931472
    %v205 = vmax.f32 %v202, -100.0
    %v206 = vmax.f32 %v204, -100.0
    %v207 = vsub.f32 1.0, %v197
    %v208 = vsub.f32 1.0, %v198
    %v209 = vlog2.pop %v207
    %v210 = vmul.f32 %v209, 0.6931472
    %v211 = vlog2.pop %v208
    %v212 = vmul.f32 %v211, 0.6931472
    %v213 = vmax.f32 %v210, -100.0
    %v214 = vmax.f32 %v212, -100.0
    %v215 = vmul.f32 %v199, %v205
    %v216 = vmul.f32 %v200, %v206
    %v217 = vsub.f32 1.0, %v199
    %v218 = vsub.f32 1.0, %v200
    %v219 = vmul.f32 %v217, %v213
    %v220 = vmul.f32 %v218, %v214
    %v221 = vadd.f32 %v215, %v219
    %v222 = vadd.f32 %v216, %v220
    %v223 = vsub.f32 0.0, %v221
    %v224 = vsub.f32 0.0, %v222
    %v225 = vadd.f32 %v195, %v223
    %v226 = vadd.f32 %v196, %v224
    %v227 = vld [vmem:[#allocation10] sm:$0xff]
    %v228 = vld [vmem:[#allocation10 + $0x8] sm:$0xff]
    %v229 = vld [vmem:[%s159] sm:$0xff]
    %v230 = vld [vmem:[%s159 + $0x8] sm:$0xff]
    %v231 = vlog2.pop %v227
    %v232 = vmul.f32 %v231, 0.6931472
    %v233 = vlog2.pop %v228
    %v234 = vmul.f32 %v233, 0.6931472
    %v235 = vmax.f32 %v232, -100.0
    %v236 = vmax.f32 %v234, -100.0
    %v237 = vsub.f32 1.0, %v227
    %v238 = vsub.f32 1.0, %v228
    %v239 = vlog2.pop %v237
    %v240 = vmul.f32 %v239, 0.6931472
    %v241 = vlog2.pop %v238
    %v242 = vmul.f32 %v241, 0.6931472
    %v243 = vmax.f32 %v240, -100.0
    %v244 = vmax.f32 %v242, -100.0
    %v245 = vmul.f32 %v229, %v235
    %v246 = vmul.f32 %v230, %v236
    %v247 = vsub.f32 1.0, %v229
    %v248 = vsub.f32 1.0, %v230
    %v249 = vmul.f32 %v247, %v243
    %v250 = vmul.f32 %v248, %v244
    %v251 = vadd.f32 %v245, %v249
    %v252 = vadd.f32 %v246, %v250
    %v253 = vsub.f32 0.0, %v251
    %v254 = vsub.f32 0.0, %v252
    %v255 = vadd.f32 %v225, %v253
    %v256 = vadd.f32 %v226, %v254
    %v258 = vrot.slane %v255, 2
    %v260 = vadd.f32 %v255, %v258
    %v261 = vrot.slane %v255, 4
    %v263 = vrot.slane %v255, 6
    %v265 = vadd.f32 %v261, %v263
    %v267 = vrot.slane %v256, 2
    %v269 = vadd.f32 %v256, %v267
    %v270 = vrot.slane %v256, 4
    %v272 = vrot.slane %v256, 6
    %v274 = vadd.f32 %v270, %v272
    %v275 = vadd.f32 %v260, %v265
    %v276 = vadd.f32 %v269, %v274
    %v277 = vadd.f32 %v275, %v276
    %v278 = vld [vmem:[#allocation11] sm:$0x3]
    %v279 = vadd.f32 %v278, %v277
    %280 = vst [vmem:[#allocation11] sm:$0x3] %v279
    // Predicated region
    $region50: #{tpu_custom_call.1} parent=1 // pred_check
      _
    $region51: #{tpu_custom_call.1} parent=1 // pred_check_branch
      %282 = sbr.rel (0) target = $region53
    $region52: #{tpu_custom_call.1} parent=1 // pred_region
      %s284 = ssub.s32 32, 32
      %285 = vsyncadd [#allocation4], %s284
      %s287 = sshll.u32 [#allocation11], 4
      %s288 = int_to_ptr.vmem [resolvable:$true] %s287
      %290 = dma.vmem_to_hbm [thread:$0]  %s288, 32, %s6, [#allocation4]
    $region53: #{tpu_custom_call.1} parent=1 // pred_fallthru
      _
    // Predicated region
    $region54: #{tpu_custom_call.1} parent=1 // pred_check
      _
    $region55: #{tpu_custom_call.1} parent=1 // pred_check_branch
      %292 = sbr.rel (0) target = $region57
    $region56: #{tpu_custom_call.1} parent=1 // pred_region
      %293 = dma.done [#allocation4], 32
    $region57: #{tpu_custom_call.1} parent=1 // pred_fallthru
      _
    %294 = vsyncpa [#allocation3], 1
    %295 = vsyncpa [#allocation6], 1
    %296 = vsyncpa [#allocation9], 1
    %297 = vsyncpa [#allocation4], 1

</llo_original>
